<compile_context>
chip_gen: v7x
topology: tpu7x:2x2x1
jax: 0.10.0
libtpu: 0.0.40
codegen_flags: <defaults>
</compile_context>

<pallas_src>
import functools
import re

import jax
import jax.numpy as jnp
from jax.experimental import pallas as pl
from jax.experimental.pallas import tpu as pltpu


# ---------------------------------------------------------------------------
# Chip-generation-dependent defaults (score dtype, VMEM cap, tile sizes).
# ---------------------------------------------------------------------------
def _chip_defaults():
    kind = ""
    try:
        kind = jax.devices()[0].device_kind.lower()
    except Exception:
        pass
    m = re.search(r"(\d+)", kind)
    gen = int(m.group(1)) if m else 7          # unknown -> conservative (v7-ish)
    is_v7_plus = gen >= 7
    has_bf16_vpu = gen >= 6                    # v6e/v7x have bf16 VALU/EUP
    score_dtype = jnp.bfloat16 if has_bf16_vpu else jnp.float32
    vmem_limit = (48 if is_v7_plus else 96) * 1024 * 1024
    tile_dst = 128 if is_v7_plus else 256
    tile_rows = 512 if is_v7_plus else 1024
    return score_dtype, vmem_limit, tile_dst, tile_rows


def _round_up(n, m):
    return (n + m - 1) // m * m


def _fit_tile(n, want):
    """Largest multiple-of-128 tile <= want that divides n (n % 128 == 0)."""
    t = min(want, n)
    while t > 128 and n % t:
        t -= 128
    return t


# ---------------------------------------------------------------------------
# Kernel 1: fused per-layer projection (single MXU matmul, single wide output).
#   slab = [h | 1] @ [ per-head (W_h | ones-col) | Wr | Wl ]
#   slab[:, :H*(F+1)]          per-head [feat | 1] blocks (bf16 storage)
#   slab[:, H*(F+1):H*(F+1)+H] er (destination attention scores)
#   slab[:, H*(F+1)+H:]        el (source attention scores)
# ---------------------------------------------------------------------------
def gat_proj_kernel(h_ref, w_ref, out_ref, *, mxu_dtype):
    out_ref[...] = jnp.dot(
        h_ref[...].astype(mxu_dtype), w_ref[...].astype(mxu_dtype),
        preferred_element_type=jnp.float32).astype(out_ref.dtype)


# ---------------------------------------------------------------------------
# Kernel 2: masked edge-softmax + aggregation, one destination-row tile per
# grid step, all heads inside the step, direct per-head stores into out_ref.
# ---------------------------------------------------------------------------
def gat_attn_kernel(featp_ref, er_ref, elt_ref, adj_ref, out_ref, *,
                    num_heads, out_feats, negative_slope, apply_act,
                    mxu_dtype, score_dtype):
    fp = out_feats + 1
    zero = jnp.asarray(0.0, score_dtype)
    neg_big = jnp.asarray(-1e30, score_dtype)
    slope = jnp.asarray(negative_slope, score_dtype)

    # Hoisted per-tile work (shared by all heads): additive mask bias and the
    # zero-in-degree guard.  adjacency arrives as int8 {0,1}.
    adjf = adj_ref[...].astype(score_dtype)                     # (Td, N)
    bias = jnp.where(adjf > zero, zero, neg_big)                # (Td, N)
    has_edge = jnp.max(bias, axis=-1, keepdims=True) >= zero    # (Td, 1)

    featp = featp_ref[...]                       # (N, H*(F+1)) bf16, resident
    er_all = er_ref[...].astype(score_dtype)     # (Td, H) dst scores
    elt_all = elt_ref[...].astype(score_dtype)   # (H, N)  src scores, resident

    for hh in range(num_heads):                  # H <= 4: static unroll
        feat_h = featp[:, hh * fp:(hh + 1) * fp]                 # (N, F+1)
        e = er_all[:, hh:hh + 1] + elt_all[hh:hh + 1, :]         # (Td, N)
        e = jnp.where(e > zero, e, slope * e)                    # LeakyReLU
        e = e + bias                                             # additive mask
        m = jnp.max(e, axis=-1, keepdims=True)
        p = jnp.exp(e - m)                       # bf16 on v6e/v7x, f32 on v5e
        # num AND denom from one MXU matmul (last column of feat_h is ones).
        nd = jnp.dot(p.astype(mxu_dtype), feat_h.astype(mxu_dtype),
                     preferred_element_type=jnp.float32)         # (Td, F+1)
        denom = jnp.maximum(nd[:, out_feats:out_feats + 1], 1e-6)
        o = nd[:, :out_feats] * pl.reciprocal(denom, approx=True)
        if apply_act:
            o = jnp.maximum(o, 0.0)                              # ReLU hidden
        o = jnp.where(has_edge, o, 0.0)          # isolated nodes -> 0 (DGL-ish)
        out_ref[:, hh * out_feats:(hh + 1) * out_feats] = o.astype(out_ref.dtype)


# ---------------------------------------------------------------------------
# Wrapper: one GATConv layer.
# ---------------------------------------------------------------------------
def _build_w_full(W, attn_l, attn_r):
    """(Din+1, H*(F+1)+2H): per-head [W_h | ones-col] blocks, then Wr, Wl."""
    din, c = W.shape
    h, f = attn_l.shape
    w3 = W.reshape(din, h, f)
    wr = jnp.einsum("dhf,hf->dh", w3, attn_r)                      # dst scores
    wl = jnp.einsum("dhf,hf->dh", w3, attn_l)                      # src scores
    feat_cols = jnp.concatenate([w3, jnp.zeros((din, h, 1), W.dtype)], axis=-1)
    ones_row = jnp.concatenate(
        [jnp.zeros((1, h, f), W.dtype), jnp.ones((1, h, 1), W.dtype)], axis=-1)
    feat_block = jnp.concatenate([feat_cols, ones_row],
                                 axis=0).reshape(din + 1, h * (f + 1))
    score_block = jnp.concatenate([wr, wl], axis=1)                # (Din, 2H)
    score_block = jnp.concatenate(
        [score_block, jnp.zeros((1, 2 * h), W.dtype)], axis=0)
    return jnp.concatenate([feat_block, score_block], axis=1)


def gat_conv_pallas(h, W, attn_l, attn_r, adj_i8, *, negative_slope=0.2,
                    apply_act=True, out_dtype=jnp.float32,
                    mxu_dtype=jnp.bfloat16, score_dtype=None,
                    tile_rows=None, tile_dst=None, vmem_limit_bytes=None):
    """h: (N, Din); W: (Din, H*F); attn_l/attn_r: (H, F);
    adj_i8: (N, N) int8 adjacency adj[dst, src] in {0,1}.  N % 128 == 0.
    Returns (N, H*F) in head-major lane-dense layout (== flatten(1))."""
    sd_def, vl_def, td_def, tr_def = _chip_defaults()
    score_dtype = sd_def if score_dtype is None else score_dtype
    vmem_limit_bytes = vl_def if vmem_limit_bytes is None else vmem_limit_bytes
    tile_rows = tr_def if tile_rows is None else tile_rows
    tile_dst = td_def if tile_dst is None else tile_dst

    n, din = h.shape
    nh, f = attn_l.shape
    assert n % 128 == 0, "pad N to a multiple of 128 before calling"
    cp = nh * (f + 1)                     # per-head [feat | 1] blocks
    width = cp + 2 * nh

    w_full = _build_w_full(W, attn_l, attn_r)                  # (Din+1, width)
    h_aug = jnp.concatenate([h, jnp.ones((n, 1), h.dtype)], axis=1)

    tr = _fit_tile(n, tile_rows)
    td = _fit_tile(n, tile_dst)

    proj_cost = pl.CostEstimate(
        flops=2 * n * (din + 1) * width, transcendentals=0,
        bytes_accessed=n * (din + 1) * jnp.dtype(h.dtype).itemsize
        + (din + 1) * width * 4 + n * width * 2)

    slab = pl.pallas_call(
        functools.partial(gat_proj_kernel, mxu_dtype=mxu_dtype),
        grid=(n // tr,),
        in_specs=[
            pl.BlockSpec((tr, din + 1), lambda i: (i, 0)),     # [h | 1] rows
            pl.BlockSpec((din + 1, width), lambda i: (0, 0)),  # full weights
        ],
        out_specs=pl.BlockSpec((tr, width), lambda i: (i, 0)),
        out_shape=jax.ShapeDtypeStruct((n, width), mxu_dtype),
        compiler_params=pltpu.CompilerParams(
            dimension_semantics=("parallel",),
            vmem_limit_bytes=vmem_limit_bytes),
        cost_estimate=proj_cost,
    )(h_aug, w_full)

    featp = slab[:, :cp]                 # (N, H*(F+1)) bf16
    er = slab[:, cp:cp + nh]             # (N, H) bf16 dst scores
    elt = slab[:, cp + nh:].T            # (H, N) bf16 src scores (tiny XLA op)

    attn_cost = pl.CostEstimate(
        flops=2 * n * n * nh * (f + 1) + 7 * n * n * nh,
        transcendentals=n * n * nh,
        bytes_accessed=n * n * 1 + n * cp * 2 + 2 * n * nh * 2
        + n * nh * f * jnp.dtype(out_dtype).itemsize)

    out = pl.pallas_call(
        functools.partial(gat_attn_kernel, num_heads=nh, out_feats=f,
                          negative_slope=negative_slope, apply_act=apply_act,
                          mxu_dtype=mxu_dtype, score_dtype=score_dtype),
        grid=(n // td,),
        in_specs=[
            pl.BlockSpec((n, cp), lambda i: (0, 0)),    # src [feat|1] (resident)
            pl.BlockSpec((td, nh), lambda i: (i, 0)),   # dst scores per tile
            pl.BlockSpec((nh, n), lambda i: (0, 0)),    # src scores (resident)
            pl.BlockSpec((td, n), lambda i: (i, 0)),    # int8 adjacency tile
        ],
        out_specs=pl.BlockSpec((td, nh * f), lambda i: (i, 0)),
        out_shape=jax.ShapeDtypeStruct((n, nh * f), out_dtype),
        compiler_params=pltpu.CompilerParams(
            dimension_semantics=("parallel",),
            vmem_limit_bytes=vmem_limit_bytes),
        cost_estimate=attn_cost,
    )(featp, er, elt, adj_i8)
    return out


# ---------------------------------------------------------------------------
# Parameter init + full-model forward (mirrors GAT.__init__ / GAT.forward).
# ---------------------------------------------------------------------------
def init_gat_params(key, num_layers, input_dim, hidden_dim, output_dim,
                    num_heads):
    hidden = hidden_dim // num_heads
    layer_cfg = [(input_dim, hidden, num_heads, True)]
    for _ in range(1, num_layers - 1):
        layer_cfg.append((hidden * num_heads, hidden, num_heads, True))
    layer_cfg.append((hidden * num_heads, output_dim, 1, False))

    params = []
    for (din, fout, hds, act) in layer_cfg:
        key, k1, k2, k3 = jax.random.split(key, 4)
        w = jax.random.normal(k1, (din, hds * fout), jnp.float32) * jnp.sqrt(
            2.0 / din)
        gain = jnp.sqrt(2.0 / (1.0 + fout))
        al = jax.random.normal(k2, (hds, fout), jnp.float32) * gain
        ar = jax.random.normal(k3, (hds, fout), jnp.float32) * gain
        params.append(dict(W=w, attn_l=al, attn_r=ar, apply_act=act))
    return params


def gat_forward(feats, adj, params, num_layers, negative_slope=0.2):
    n = feats.shape[0]
    n_pad = _round_up(n, 128)
    score_dtype, _, _, _ = _chip_defaults()

    adj_i8 = (adj > 0).astype(jnp.int8)
    if n_pad != n:
        adj_i8 = jnp.pad(adj_i8, ((0, n_pad - n), (0, n_pad - n)))
        feats = jnp.pad(feats, ((0, n_pad - n), (0, 0)))

    h = feats
    h_list = [h[:n]]
    for l, p in enumerate(params):
        last = (l == num_layers - 1)
        out = gat_conv_pallas(
            h, p["W"], p["attn_l"], p["attn_r"], adj_i8,
            negative_slope=negative_slope, apply_act=p["apply_act"],
            out_dtype=jnp.float32 if last else jnp.bfloat16,
            score_dtype=score_dtype)
        nh, f = p["attn_l"].shape
        if not last:
            h = out                                       # == flatten(1)
        else:
            h = out.reshape(n_pad, nh, f).mean(axis=1)    # mean over heads
        h_list.append(h[:n])
    return h[:n], h_list


# ---------------------------------------------------------------------------
# Pure-JAX reference mirroring the kernel's math (bf16 MXU casts, bf16 slab,
# bf16/f32 score chain, additive mask, denom-from-matmul, zero-degree guard).
# ---------------------------------------------------------------------------
def gat_conv_ref(h, W, attn_l, attn_r, adj, *, negative_slope=0.2,
                 apply_act=True, out_dtype=jnp.float32,
                 mxu_dtype=jnp.bfloat16, score_dtype=jnp.float32):
    n = h.shape[0]
    nh, f = attn_l.shape
    fp = f + 1
    cp = nh * fp
    w_full = _build_w_full(W, attn_l, attn_r)
    h_aug = jnp.concatenate([h, jnp.ones((n, 1), h.dtype)], axis=1)
    slab = jnp.dot(h_aug.astype(mxu_dtype), w_full.astype(mxu_dtype),
                   preferred_element_type=jnp.float32).astype(mxu_dtype)
    featp = slab[:, :cp]
    er = slab[:, cp:cp + nh].astype(score_dtype)
    el = slab[:, cp + nh:].astype(score_dtype)
    zero = jnp.asarray(0.0, score_dtype)
    neg_big = jnp.asarray(-1e30, score_dtype)
    slope = jnp.asarray(negative_slope, score_dtype)
    adjf = (adj > 0).astype(score_dtype)
    bias = jnp.where(adjf > zero, zero, neg_big)
    has_edge = jnp.max(bias, axis=-1, keepdims=True) >= zero
    outs = []
    for hh in range(nh):
        feat_h = featp[:, hh * fp:(hh + 1) * fp]
        e = er[:, hh:hh + 1] + el[:, hh][None, :]
        e = jnp.where(e > zero, e, slope * e)
        e = e + bias
        m = jnp.max(e, axis=-1, keepdims=True)
        p = jnp.exp(e - m)
        nd = jnp.dot(p.astype(mxu_dtype), feat_h.astype(mxu_dtype),
                     preferred_element_type=jnp.float32)
        denom = jnp.maximum(nd[:, f:f + 1], 1e-6)
        o = nd[:, :f] / denom
        if apply_act:
            o = jnp.maximum(o, 0.0)
        o = jnp.where(has_edge, o, 0.0)
        outs.append(o)
    return jnp.concatenate(outs, axis=-1).astype(out_dtype)


if __name__ == "__main__":
    key = jax.random.PRNGKey(0)

    num_layers = 3
    N = 256             # graph nodes (multiple of 128 -> 1-2 dst tiles)
    input_dim = 16
    hidden_dim = 32     # divided by num_heads inside GAT.__init__
    output_dim = 6
    num_heads = 4

    key, kfeat, kadj = jax.random.split(key, 3)
    feats = jax.random.normal(kfeat, (N, input_dim), jnp.float32)

    # Random directed graph with guaranteed self-loops (dense adjacency).
    adj = (jax.random.uniform(kadj, (N, N)) < 0.05).astype(jnp.float32)
    adj = jnp.maximum(adj, jnp.eye(N, dtype=jnp.float32))

    params = init_gat_params(key, num_layers, input_dim, hidden_dim,
                             output_dim, num_heads)

    h_out, h_list = gat_forward(feats, adj, params, num_layers)
    h_out = jax.block_until_ready(h_out)

    # Sanity check against the pure-JAX reference (same score dtype as kernel).
    score_dtype, _, _, _ = _chip_defaults()
    h_ref = feats
    for l, p in enumerate(params):
        last = (l == num_layers - 1)
        o = gat_conv_ref(h_ref, p["W"], p["attn_l"], p["attn_r"], adj,
                         apply_act=p["apply_act"],
                         out_dtype=jnp.float32 if last else jnp.bfloat16,
                         score_dtype=score_dtype)
        nh, f = p["attn_l"].shape
        h_ref = o if not last else o.reshape(N, nh, f).mean(axis=1)
    h_ref = jnp.asarray(h_ref, jnp.float32)

    assert h_out.shape == (N, output_dim), h_out.shape
    assert len(h_list) == num_layers + 1
    assert bool(jnp.all(jnp.isfinite(h_out)))
    max_err = float(jnp.max(jnp.abs(h_out - h_ref)))
    assert jnp.allclose(h_out, h_ref, atol=5e-2, rtol=5e-2), (
        f"mismatch vs ref, max abs err={max_err}")

    print("KERNEL_OK")
</pallas_src>

<mosaic_0001>
module attributes {stable_mosaic.version = 11 : i64} {
  func.func @gat_proj_kernel(%arg0: i32, %arg1: memref<256x17xf32, #tpu.memory_space<vmem>>, %arg2: memref<17x44xf32, #tpu.memory_space<vmem>>, %arg3: memref<256x44xbf16, #tpu.memory_space<vmem>>) attributes {dimension_semantics = [#tpu.dimension_semantics<parallel>], iteration_bounds = array<i64: 1>, scalar_prefetch = 0 : i64, scratch_operands = 0 : i64, tpu.core_type = #tpu.core_type<tc>, window_params = [{transform_indices = @transform_0, window_bounds = array<i64: 256, 17>}, {pipeline_mode = #tpu.pipeline_mode<synchronous>, transform_indices = @transform_1, window_bounds = array<i64: 17, 44>}, {transform_indices = @transform_2, window_bounds = array<i64: 256, 44>}]} {
    %c0 = arith.constant 0 : index
    %c0_0 = arith.constant 0 : index
    %0 = vector.load %arg1[%c0, %c0_0] : memref<256x17xf32, #tpu.memory_space<vmem>>, vector<256x17xf32>
    %1 = arith.truncf %0 : vector<256x17xf32> to vector<256x17xbf16>
    %c0_1 = arith.constant 0 : index
    %c0_2 = arith.constant 0 : index
    %2 = vector.load %arg2[%c0_1, %c0_2] : memref<17x44xf32, #tpu.memory_space<vmem>>, vector<17x44xf32>
    %3 = arith.truncf %2 : vector<17x44xf32> to vector<17x44xbf16>
    %cst = arith.constant dense<0.000000e+00> : vector<256x44xf32>
    %4 = tpu.matmul %1, %3, %cst {dimension_numbers = #tpu.dot_dimension_numbers<[1], [0], [0], [1], [0, 0, 1, 1], [], []>} : vector<256x17xbf16>, vector<17x44xbf16>, vector<256x44xf32> -> vector<256x44xf32>
    %5 = arith.truncf %4 : vector<256x44xf32> to vector<256x44xbf16>
    %c0_3 = arith.constant 0 : index
    %c0_4 = arith.constant 0 : index
    %6 = vector.load %arg3[%c0_3, %c0_4] : memref<256x44xbf16, #tpu.memory_space<vmem>>, vector<256x44xbf16>
    tpu.vector_store %arg3[%c0_3, %c0_4], %5 {strides = array<i32>} : memref<256x44xbf16, #tpu.memory_space<vmem>>, vector<256x44xbf16>,
    return
  }
  func.func @transform_0(%arg0: i32) -> (i32, i32) {
    %c0_i32 = arith.constant 0 : i32
    %c0_i32_0 = arith.constant 0 : i32
    return %arg0, %c0_i32 : i32, i32
  }
  func.func @transform_1(%arg0: i32) -> (i32, i32) {
    %c0_i32 = arith.constant 0 : i32
    %c0_i32_0 = arith.constant 0 : i32
    %c0_i32_1 = arith.constant 0 : i32
    return %c0_i32, %c0_i32_0 : i32, i32
  }
  func.func @transform_2(%arg0: i32) -> (i32, i32) {
    %c0_i32 = arith.constant 0 : i32
    %c0_i32_0 = arith.constant 0 : i32
    return %arg0, %c0_i32 : i32, i32
  }
}

</mosaic_0001>

<llo_original>
// kernel: tpu_custom_call.1
$region0: #{tpu_custom_call.1}
  #allocation0 [shape = 'u32[]', space=smem, size = 0x4, offset = 0x4, fixed_abs, tag = 'smem constant byte address 0x4 - core index']
  #allocation1 [shape = 'u32[144,128]{1,0:T(1,128)}', space=vmem, size = 0x12000, scoped, tag = 'internal scratch']
  %s0 = inlined_call_operand.vmem [shape: f32[256,17], index: 0, kind: input, shape index: {}]
  %s1 = inlined_call_operand.vmem [shape: f32[17,44], index: 1, kind: input, shape index: {}]
  %s2 = inlined_call_operand.vmem [shape: bf16[256,44], index: 2, kind: output, shape index: {}]
  %s3 = sld [smem:[#allocation0]]
  $region18: #{tpu_custom_call.1} parent=0
    _
  %s5 = ssub.s32 1, %s3
  %s6 = scalar_select 0, %s5, %s3
  // Predicated region
  $region2: #{tpu_custom_call.1} parent=0 // pred_check
    _
  $region3: #{tpu_custom_call.1} parent=0 // pred_check_branch
    %8 = sbr.rel (0) target = $region5
  $region4: #{tpu_custom_call.1} parent=0 // pred_region
    _
  $region5: #{tpu_custom_call.1} parent=0 // pred_fallthru
    _
  // Predicated region
  $region6: #{tpu_custom_call.1} parent=0 // pred_check
    _
  $region7: #{tpu_custom_call.1} parent=0 // pred_check_branch
    %10 = sbr.rel (0) target = $region9
  $region8: #{tpu_custom_call.1} parent=0 // pred_region
    _
  $region9: #{tpu_custom_call.1} parent=0 // pred_fallthru
    _
  %v12 = vld [vmem:[%s0] sm:$0xff]
  %v13 = vld [vmem:[%s0 + $0x8] sm:$0xff]
  %v14 = vld [vmem:[%s0 + $0x10] sm:$0xff]
  %v15 = vld [vmem:[%s0 + $0x18] sm:$0xff]
  %v16 = vld [vmem:[%s0 + $0x20] sm:$0xff]
  %v17 = vld [vmem:[%s0 + $0x28] sm:$0xff]
  %v18 = vld [vmem:[%s0 + $0x30] sm:$0xff]
  %v19 = vld [vmem:[%s0 + $0x38] sm:$0xff]
  %v20 = vld [vmem:[%s0 + $0x40] sm:$0xff]
  %v21 = vld [vmem:[%s0 + $0x48] sm:$0xff]
  %v22 = vld [vmem:[%s0 + $0x50] sm:$0xff]
  %v23 = vld [vmem:[%s0 + $0x58] sm:$0xff]
  %v24 = vld [vmem:[%s0 + $0x60] sm:$0xff]
  %v25 = vld [vmem:[%s0 + $0x68] sm:$0xff]
  %v26 = vld [vmem:[%s0 + $0x70] sm:$0xff]
  %v27 = vld [vmem:[%s0 + $0x78] sm:$0xff]
  %v28 = vld [vmem:[%s0 + $0x80] sm:$0xff]
  %v29 = vld [vmem:[%s0 + $0x88] sm:$0xff]
  %v30 = vld [vmem:[%s0 + $0x90] sm:$0xff]
  %v31 = vld [vmem:[%s0 + $0x98] sm:$0xff]
  %v32 = vld [vmem:[%s0 + $0xa0] sm:$0xff]
  %v33 = vld [vmem:[%s0 + $0xa8] sm:$0xff]
  %v34 = vld [vmem:[%s0 + $0xb0] sm:$0xff]
  %v35 = vld [vmem:[%s0 + $0xb8] sm:$0xff]
  %v36 = vld [vmem:[%s0 + $0xc0] sm:$0xff]
  %v37 = vld [vmem:[%s0 + $0xc8] sm:$0xff]
  %v38 = vld [vmem:[%s0 + $0xd0] sm:$0xff]
  %v39 = vld [vmem:[%s0 + $0xd8] sm:$0xff]
  %v40 = vld [vmem:[%s0 + $0xe0] sm:$0xff]
  %v41 = vld [vmem:[%s0 + $0xe8] sm:$0xff]
  %v42 = vld [vmem:[%s0 + $0xf0] sm:$0xff]
  %v43 = vld [vmem:[%s0 + $0xf8] sm:$0xff]
  %v44 = vpack.c.bf16 %v13, %v12
  %v45 = vpack.c.bf16 %v15, %v14
  %v46 = vpack.c.bf16 %v17, %v16
  %v47 = vpack.c.bf16 %v19, %v18
  %v48 = vpack.c.bf16 %v21, %v20
  %v49 = vpack.c.bf16 %v23, %v22
  %v50 = vpack.c.bf16 %v25, %v24
  %v51 = vpack.c.bf16 %v27, %v26
  %v52 = vpack.c.bf16 %v29, %v28
  %v53 = vpack.c.bf16 %v31, %v30
  %v54 = vpack.c.bf16 %v33, %v32
  %v55 = vpack.c.bf16 %v35, %v34
  %v56 = vpack.c.bf16 %v37, %v36
  %v57 = vpack.c.bf16 %v39, %v38
  %v58 = vpack.c.bf16 %v41, %v40
  %v59 = vpack.c.bf16 %v43, %v42
  %v60 = vld [vmem:[%s1] sm:$0xff]
  %v61 = vld [vmem:[%s1 + $0x8] sm:$0xff]
  %v62 = vld [vmem:[%s1 + $0x10] sm:$0x1]
  %v63 = vpack.c.bf16 %v61, %v60
  %v64 = vpack.c.bf16 %v62, %v62
  %vm65 = vcmask 138240
  %v67 = vsel %vm65, %v44, 0
  %v70 = vsel %vm65, %v45, 0
  %v73 = vsel %vm65, %v46, 0
  %v76 = vsel %vm65, %v47, 0
  %v79 = vsel %vm65, %v48, 0
  %v82 = vsel %vm65, %v49, 0
  %v85 = vsel %vm65, %v50, 0
  %v88 = vsel %vm65, %v51, 0
  %v91 = vsel %vm65, %v52, 0
  %v94 = vsel %vm65, %v53, 0
  %v97 = vsel %vm65, %v54, 0
  %v100 = vsel %vm65, %v55, 0
  %v103 = vsel %vm65, %v56, 0
  %v106 = vsel %vm65, %v57, 0
  %v109 = vsel %vm65, %v58, 0
  %v112 = vsel %vm65, %v59, 0
  %vm114 = vcmask 1040384
  %v115 = vsel 0, 4294967295, 65535
  %v116 = vsel %vm114, %v115, 0
  %v118 = vand.u32 %v64, %v116
  %120 = vmatprep.subr.bf16.mxu0 0
  %121 = vmatpush1.bf16.msra.mxu0 %v63
  %122 = vmatprep.subr.bf16.mxu0 0
  %123 = vmatpush1.bf16.msra.mxu0 %v118
  %124 = vmatprep.subr.bf16.mxu0 0
  %125 = vmatpush1.bf16.msra.mxu0 0
  %126 = vmatprep.subr.bf16.mxu0 0
  %127 = vmatpush1.bf16.msra.mxu0 0
  %128 = vmatprep.subr.bf16.mxu0 0
  %129 = vmatpush1.bf16.msra.mxu0 0
  %130 = vmatprep.subr.bf16.mxu0 0
  %131 = vmatpush1.bf16.msra.mxu0 0
  %132 = vmatprep.subr.bf16.mxu0 0
  %133 = vmatpush1.bf16.msra.mxu0 0
  %134 = vmatprep.subr.bf16.mxu0 0
  %135 = vmatpush1.bf16.msra.mxu0 0
  %136 = vmatprep.subr.bf16.mxu0 0
  %137 = vmatpush1.bf16.msra.mxu0 0
  %138 = vmatprep.subr.bf16.mxu0 0
  %139 = vmatpush1.bf16.msra.mxu0 0
  %140 = vmatprep.subr.bf16.mxu0 0
  %141 = vmatpush1.bf16.msra.mxu0 0
  %142 = vmatprep.subr.bf16.mxu0 0
  %143 = vmatpush1.bf16.msra.mxu0 0
  %144 = vmatprep.subr.bf16.mxu0 0
  %145 = vmatpush1.bf16.msra.mxu0 0
  %146 = vmatprep.subr.bf16.mxu0 0
  %147 = vmatpush1.bf16.msra.mxu0 0
  %148 = vmatprep.subr.bf16.mxu0 0
  %149 = vmatpush1.bf16.msra.mxu0 0
  %150 = vmatprep.subr.bf16.mxu0 0
  %151 = vmatpush1.bf16.msra.mxu0 0
  %152 = vmatprep.mubr.bf16.mxu0 0
  %153 = vmatmul.mubr.bf16.gmra.mrb[0].mxu0 %v67
  %v154 = vpop.f32.mrb[0].mxu0
  %v155 = vadd.f32 0.0, %v154
  %v156 = vpop.f32.mrb[0].mxu0
  %v157 = vpop.f32.mrb[0].mxu0
  %v158 = vadd.f32 0.0, %v157
  %v159 = vpop.f32.mrb[0].mxu0
  %160 = vmatprep.mubr.bf16.mxu0 0
  %161 = vmatmul.mubr.bf16.gmra.mrb[0].mxu0 %v70
  %v162 = vpop.f32.mrb[0].mxu0
  %v163 = vadd.f32 0.0, %v162
  %v164 = vpop.f32.mrb[0].mxu0
  %v165 = vpop.f32.mrb[0].mxu0
  %v166 = vadd.f32 0.0, %v165
  %v167 = vpop.f32.mrb[0].mxu0
  %168 = vmatprep.mubr.bf16.mxu0 0
  %169 = vmatmul.mubr.bf16.gmra.mrb[0].mxu0 %v73
  %v170 = vpop.f32.mrb[0].mxu0
  %v171 = vadd.f32 0.0, %v170
  %v172 = vpop.f32.mrb[0].mxu0
  %v173 = vpop.f32.mrb[0].mxu0
  %v174 = vadd.f32 0.0, %v173
  %v175 = vpop.f32.mrb[0].mxu0
  %176 = vmatprep.mubr.bf16.mxu0 0
  %177 = vmatmul.mubr.bf16.gmra.mrb[0].mxu0 %v76
  %v178 = vpop.f32.mrb[0].mxu0
  %v179 = vadd.f32 0.0, %v178
  %v180 = vpop.f32.mrb[0].mxu0
  %v181 = vpop.f32.mrb[0].mxu0
  %v182 = vadd.f32 0.0, %v181
  %v183 = vpop.f32.mrb[0].mxu0
  %184 = vmatprep.mubr.bf16.mxu0 0
  %185 = vmatmul.mubr.bf16.gmra.mrb[0].mxu0 %v79
  %v186 = vpop.f32.mrb[0].mxu0
  %v187 = vadd.f32 0.0, %v186
  %v188 = vpop.f32.mrb[0].mxu0
  %v189 = vpop.f32.mrb[0].mxu0
  %v190 = vadd.f32 0.0, %v189
  %v191 = vpop.f32.mrb[0].mxu0
  %192 = vmatprep.mubr.bf16.mxu0 0
  %193 = vmatmul.mubr.bf16.gmra.mrb[0].mxu0 %v82
  %v194 = vpop.f32.mrb[0].mxu0
  %v195 = vadd.f32 0.0, %v194
  %v196 = vpop.f32.mrb[0].mxu0
  %v197 = vpop.f32.mrb[0].mxu0
  %v198 = vadd.f32 0.0, %v197
  %v199 = vpop.f32.mrb[0].mxu0
  %200 = vmatprep.mubr.bf16.mxu0 0
  %201 = vmatmul.mubr.bf16.gmra.mrb[0].mxu0 %v85
  %v202 = vpop.f32.mrb[0].mxu0
  %v203 = vadd.f32 0.0, %v202
  %v204 = vpop.f32.mrb[0].mxu0
  %v205 = vpop.f32.mrb[0].mxu0
  %v206 = vadd.f32 0.0, %v205
  %v207 = vpop.f32.mrb[0].mxu0
  %208 = vmatprep.mubr.bf16.mxu0 0
  %209 = vmatmul.mubr.bf16.gmra.mrb[0].mxu0 %v88
  %v210 = vpop.f32.mrb[0].mxu0
  %v211 = vadd.f32 0.0, %v210
  %v212 = vpop.f32.mrb[0].mxu0
  %v213 = vpop.f32.mrb[0].mxu0
  %v214 = vadd.f32 0.0, %v213
  %v215 = vpop.f32.mrb[0].mxu0
  %216 = vmatprep.mubr.bf16.mxu0 0
  %217 = vmatmul.mubr.bf16.gmra.mrb[0].mxu0 %v91
  %v218 = vpop.f32.mrb[0].mxu0
  %v219 = vadd.f32 0.0, %v218
  %v220 = vpop.f32.mrb[0].mxu0
  %v221 = vpop.f32.mrb[0].mxu0
  %v222 = vadd.f32 0.0, %v221
  %v223 = vpop.f32.mrb[0].mxu0
  %224 = vmatprep.mubr.bf16.mxu0 0
  %225 = vmatmul.mubr.bf16.gmra.mrb[0].mxu0 %v94
  %v226 = vpop.f32.mrb[0].mxu0
  %v227 = vadd.f32 0.0, %v226
  %v228 = vpop.f32.mrb[0].mxu0
  %v229 = vpop.f32.mrb[0].mxu0
  %v230 = vadd.f32 0.0, %v229
  %v231 = vpop.f32.mrb[0].mxu0
  %232 = vmatprep.mubr.bf16.mxu0 0
  %233 = vmatmul.mubr.bf16.gmra.mrb[0].mxu0 %v97
  %v234 = vpop.f32.mrb[0].mxu0
  %v235 = vadd.f32 0.0, %v234
  %v236 = vpop.f32.mrb[0].mxu0
  %v237 = vpop.f32.mrb[0].mxu0
  %v238 = vadd.f32 0.0, %v237
  %v239 = vpop.f32.mrb[0].mxu0
  %240 = vmatprep.mubr.bf16.mxu0 0
  %241 = vmatmul.mubr.bf16.gmra.mrb[0].mxu0 %v100
  %v242 = vpop.f32.mrb[0].mxu0
  %v243 = vadd.f32 0.0, %v242
  %v244 = vpop.f32.mrb[0].mxu0
  %v245 = vpop.f32.mrb[0].mxu0
  %v246 = vadd.f32 0.0, %v245
  %v247 = vpop.f32.mrb[0].mxu0
  %248 = vmatprep.mubr.bf16.mxu0 0
  %249 = vmatmul.mubr.bf16.gmra.mrb[0].mxu0 %v103
  %v250 = vpop.f32.mrb[0].mxu0
  %v251 = vadd.f32 0.0, %v250
  %v252 = vpop.f32.mrb[0].mxu0
  %v253 = vpop.f32.mrb[0].mxu0
  %v254 = vadd.f32 0.0, %v253
  %v255 = vpop.f32.mrb[0].mxu0
  %256 = vmatprep.mubr.bf16.mxu0 0
  %257 = vmatmul.mubr.bf16.gmra.mrb[0].mxu0 %v106
  %v258 = vpop.f32.mrb[0].mxu0
  %v259 = vadd.f32 0.0, %v258
  %v260 = vpop.f32.mrb[0].mxu0
  %v261 = vpop.f32.mrb[0].mxu0
  %v262 = vadd.f32 0.0, %v261
  %v263 = vpop.f32.mrb[0].mxu0
  %264 = vmatprep.mubr.bf16.mxu0 0
  %265 = vmatmul.mubr.bf16.gmra.mrb[0].mxu0 %v109
  %v266 = vpop.f32.mrb[0].mxu0
  %v267 = vadd.f32 0.0, %v266
  %v268 = vpop.f32.mrb[0].mxu0
  %v269 = vpop.f32.mrb[0].mxu0
  %v270 = vadd.f32 0.0, %v269
  %v271 = vpop.f32.mrb[0].mxu0
  %272 = vmatprep.mubr.bf16.mxu0 0
  %273 = vmatmul.mubr.bf16.gmra.mrb[0].mxu0 %v112
  %v274 = vpop.f32.mrb[0].mxu0
  %v275 = vadd.f32 0.0, %v274
  %v276 = vpop.f32.mrb[0].mxu0
  %v277 = vpop.f32.mrb[0].mxu0
  %v278 = vadd.f32 0.0, %v277
  %v279 = vpop.f32.mrb[0].mxu0
  %280 = vdwg.mxu0
  %v281 = vpack.c.bf16 %v158, %v155
  %v282 = vpack.c.bf16 %v166, %v163
  %v283 = vpack.c.bf16 %v174, %v171
  %v284 = vpack.c.bf16 %v182, %v179
  %v285 = vpack.c.bf16 %v190, %v187
  %v286 = vpack.c.bf16 %v198, %v195
  %v287 = vpack.c.bf16 %v206, %v203
  %v288 = vpack.c.bf16 %v214, %v211
  %v289 = vpack.c.bf16 %v222, %v219
  %v290 = vpack.c.bf16 %v230, %v227
  %v291 = vpack.c.bf16 %v238, %v235
  %v292 = vpack.c.bf16 %v246, %v243
  %v293 = vpack.c.bf16 %v254, %v251
  %v294 = vpack.c.bf16 %v262, %v259
  %v295 = vpack.c.bf16 %v270, %v267
  %v296 = vpack.c.bf16 %v278, %v275
  %v313 = vunpack.c.l.b16 %v281
  %v314 = vunpack.c.h.b16 %v281
  %v315 = vunpack.c.l.b16 %v282
  %v316 = vunpack.c.h.b16 %v282
  %v317 = vunpack.c.l.b16 %v283
  %v318 = vunpack.c.h.b16 %v283
  %v319 = vunpack.c.l.b16 %v284
  %v320 = vunpack.c.h.b16 %v284
  %v321 = vunpack.c.l.b16 %v285
  %v322 = vunpack.c.h.b16 %v285
  %v323 = vunpack.c.l.b16 %v286
  %v324 = vunpack.c.h.b16 %v286
  %v325 = vunpack.c.l.b16 %v287
  %v326 = vunpack.c.h.b16 %v287
  %v327 = vunpack.c.l.b16 %v288
  %v328 = vunpack.c.h.b16 %v288
  %v329 = vunpack.c.l.b16 %v289
  %v330 = vunpack.c.h.b16 %v289
  %v331 = vunpack.c.l.b16 %v290
  %v332 = vunpack.c.h.b16 %v290
  %v333 = vunpack.c.l.b16 %v291
  %v334 = vunpack.c.h.b16 %v291
  %v335 = vunpack.c.l.b16 %v292
  %v336 = vunpack.c.h.b16 %v292
  %v337 = vunpack.c.l.b16 %v293
  %v338 = vunpack.c.h.b16 %v293
  %v339 = vunpack.c.l.b16 %v294
  %v340 = vunpack.c.h.b16 %v294
  %v341 = vunpack.c.l.b16 %v295
  %v342 = vunpack.c.h.b16 %v295
  %v343 = vunpack.c.l.b16 %v296
  %v344 = vunpack.c.h.b16 %v296
  %v345 = vpack.c.b16 %v313, %v313
  %v346 = vpack.c.b16 %v314, %v314
  %v347 = vpack.c.b16 %v315, %v315
  %v348 = vpack.c.b16 %v316, %v316
  %v349 = vpack.c.b16 %v317, %v317
  %v350 = vpack.c.b16 %v318, %v318
  %v351 = vpack.c.b16 %v319, %v319
  %v352 = vpack.c.b16 %v320, %v320
  %v353 = vpack.c.b16 %v321, %v321
  %v354 = vpack.c.b16 %v322, %v322
  %v355 = vpack.c.b16 %v323, %v323
  %v356 = vpack.c.b16 %v324, %v324
  %v357 = vpack.c.b16 %v325, %v325
  %v358 = vpack.c.b16 %v326, %v326
  %v359 = vpack.c.b16 %v327, %v327
  %v360 = vpack.c.b16 %v328, %v328
  %v361 = vpack.c.b16 %v329, %v329
  %v362 = vpack.c.b16 %v330, %v330
  %v363 = vpack.c.b16 %v331, %v331
  %v364 = vpack.c.b16 %v332, %v332
  %v365 = vpack.c.b16 %v333, %v333
  %v366 = vpack.c.b16 %v334, %v334
  %v367 = vpack.c.b16 %v335, %v335
  %v368 = vpack.c.b16 %v336, %v336
  %v369 = vpack.c.b16 %v337, %v337
  %v370 = vpack.c.b16 %v338, %v338
  %v371 = vpack.c.b16 %v339, %v339
  %v372 = vpack.c.b16 %v340, %v340
  %v373 = vpack.c.b16 %v341, %v341
  %v374 = vpack.c.b16 %v342, %v342
  %v375 = vpack.c.b16 %v343, %v343
  %v376 = vpack.c.b16 %v344, %v344
  %vm409 = vcmask 355328
  %410 = vst.msk [vmem:[%s2] sm:$0xf] %vm409, %v345
  %411 = vst.msk [vmem:[%s2 + $0x4] sm:$0xf] %vm409, %v346
  %412 = vst.msk [vmem:[%s2 + $0x8] sm:$0xf] %vm409, %v347
  %413 = vst.msk [vmem:[%s2 + $0xc] sm:$0xf] %vm409, %v348
  %414 = vst.msk [vmem:[%s2 + $0x10] sm:$0xf] %vm409, %v349
  %415 = vst.msk [vmem:[%s2 + $0x14] sm:$0xf] %vm409, %v350
  %416 = vst.msk [vmem:[%s2 + $0x18] sm:$0xf] %vm409, %v351
  %417 = vst.msk [vmem:[%s2 + $0x1c] sm:$0xf] %vm409, %v352
  %418 = vst.msk [vmem:[%s2 + $0x20] sm:$0xf] %vm409, %v353
  %419 = vst.msk [vmem:[%s2 + $0x24] sm:$0xf] %vm409, %v354
  %420 = vst.msk [vmem:[%s2 + $0x28] sm:$0xf] %vm409, %v355
  %421 = vst.msk [vmem:[%s2 + $0x2c] sm:$0xf] %vm409, %v356
  %422 = vst.msk [vmem:[%s2 + $0x30] sm:$0xf] %vm409, %v357
  %423 = vst.msk [vmem:[%s2 + $0x34] sm:$0xf] %vm409, %v358
  %424 = vst.msk [vmem:[%s2 + $0x38] sm:$0xf] %vm409, %v359
  %425 = vst.msk [vmem:[%s2 + $0x3c] sm:$0xf] %vm409, %v360
  %426 = vst.msk [vmem:[%s2 + $0x40] sm:$0xf] %vm409, %v361
  %427 = vst.msk [vmem:[%s2 + $0x44] sm:$0xf] %vm409, %v362
  %428 = vst.msk [vmem:[%s2 + $0x48] sm:$0xf] %vm409, %v363
  %429 = vst.msk [vmem:[%s2 + $0x4c] sm:$0xf] %vm409, %v364
  %430 = vst.msk [vmem:[%s2 + $0x50] sm:$0xf] %vm409, %v365
  %431 = vst.msk [vmem:[%s2 + $0x54] sm:$0xf] %vm409, %v366
  %432 = vst.msk [vmem:[%s2 + $0x58] sm:$0xf] %vm409, %v367
  %433 = vst.msk [vmem:[%s2 + $0x5c] sm:$0xf] %vm409, %v368
  %434 = vst.msk [vmem:[%s2 + $0x60] sm:$0xf] %vm409, %v369
  %435 = vst.msk [vmem:[%s2 + $0x64] sm:$0xf] %vm409, %v370
  %436 = vst.msk [vmem:[%s2 + $0x68] sm:$0xf] %vm409, %v371
  %437 = vst.msk [vmem:[%s2 + $0x6c] sm:$0xf] %vm409, %v372
  %438 = vst.msk [vmem:[%s2 + $0x70] sm:$0xf] %vm409, %v373
  %439 = vst.msk [vmem:[%s2 + $0x74] sm:$0xf] %vm409, %v374
  %440 = vst.msk [vmem:[%s2 + $0x78] sm:$0xf] %vm409, %v375
  %441 = vst.msk [vmem:[%s2 + $0x7c] sm:$0xf] %vm409, %v376
  // Predicated region
  $region10: #{tpu_custom_call.1} parent=0 // pred_check
    _
  $region11: #{tpu_custom_call.1} parent=0 // pred_check_branch
    %443 = sbr.rel (0) target = $region13
  $region12: #{tpu_custom_call.1} parent=0 // pred_region
    _
  $region13: #{tpu_custom_call.1} parent=0 // pred_fallthru
    _
  // Predicated region
  $region14: #{tpu_custom_call.1} parent=0 // pred_check
    _
  $region15: #{tpu_custom_call.1} parent=0 // pred_check_branch
    %445 = sbr.rel (0) target = $region17
  $region16: #{tpu_custom_call.1} parent=0 // pred_region
    _
  $region17: #{tpu_custom_call.1} parent=0 // pred_fallthru
    _

</llo_original>
